<compile_context>
chip_gen: v5e
topology: v5e:2x2
jax: 0.10.0
libtpu: 0.0.40
codegen_flags: <defaults>
</compile_context>

<pallas_src>
import functools

import jax
import jax.numpy as jnp
from jax.experimental import pallas as pl
from jax.experimental.pallas import tpu as pltpu


def _round_up(x, m):
    return (x + m - 1) // m * m


def _vmem_budget_and_limit():
    """Generation-aware (budget, scoped-vmem-limit, multicore-hint)."""
    vmem_bytes = 64 * 1024 * 1024           # conservative default (v7x-class)
    try:
        info = pltpu.get_tpu_info()
        vmem_bytes = int(getattr(info, "vmem_capacity_bytes", vmem_bytes))
    except Exception:
        pass
    if vmem_bytes >= 100 * 1024 * 1024:     # v5e / v6e: 128 MiB physical VMEM, 1 TC
        return 88 * 1024 * 1024, 104 * 1024 * 1024, False
    # v7x-class: 64 MiB VMEM per TensorCore, 2 TCs per chip
    return 36 * 1024 * 1024, 48 * 1024 * 1024, True


# ---------------------------------------------------------------------------
# Kernel bodies. Activations are (..., C, HW) tiles: channels on sublanes,
# spatial on lanes. Weights are the raw / folded (out_c, in_c) matrices.
# ---------------------------------------------------------------------------

def _sam_fused_kernel(x_ref, w_ref, b_ref, wd1_ref, wd2_ref, o_ref):
    """Single-pass path: (Nb, C, HW) slab resident; folded conv + pool + gate."""
    x = x_ref[...]                                                    # (Nb, C, HW)
    t = jnp.einsum("oc,bcl->bol", w_ref[...], x,
                   preferred_element_type=jnp.float32) + b_ref[...]   # (Nb, C, HW)
    pooled = jnp.mean(t, axis=2, keepdims=True)                       # (Nb, C, 1)
    h = jnp.maximum(
        jnp.einsum("rc,bcl->brl", wd1_ref[...], pooled,
                   preferred_element_type=jnp.float32), 0.0)          # (Nb, Cr, 1)
    y = jax.nn.sigmoid(
        jnp.einsum("cr,brl->bcl", wd2_ref[...], h,
                   preferred_element_type=jnp.float32))               # (Nb, C, 1)
    o_ref[...] = (t * y).astype(o_ref.dtype)                          # lane broadcast


def _sam_pool_kernel(hw_total, hw_tile, x_ref, psum_ref):
    """Tiled pass 1 (pure bandwidth): per-tile partial sum of x over lanes."""
    x = x_ref[0]                                                      # (C, hw_tile)
    if hw_total % hw_tile != 0:                                       # static check
        j = pl.program_id(1)
        lane = jax.lax.broadcasted_iota(jnp.int32, x.shape, 1)
        x = jnp.where(j * hw_tile + lane < hw_total, x, 0.0)
    psum_ref[0, 0] = jnp.sum(x, axis=1, keepdims=True)                # (C, 1)


def _sam_gate_kernel(x_ref, w_ref, b_ref, y_ref, o_ref):
    """Tiled pass 2: recompute folded conv on this HW tile and gate."""
    t = jnp.dot(w_ref[...], x_ref[0],
                preferred_element_type=jnp.float32) + b_ref[...]      # (C, hw_tile)
    o_ref[0] = (t * y_ref[0]).astype(o_ref.dtype)


# ---------------------------------------------------------------------------
# Wrapper
# ---------------------------------------------------------------------------

def sam_forward(x_nchw, params, *, force_tiled=False, force_hw_tile=None,
                force_nb=None):
    """SAM forward. x_nchw: (N, C, H, W) float32 -> (N, C, H, W) float32."""
    w2, b2, w3, b3, wd1, wd2 = params
    N, C, H, W = x_nchw.shape
    HW = H * W
    Cr = wd1.shape[0]

    # Fold conv3 o conv2 into a single 1x1 conv (exact up to f32 summation order).
    w32 = jnp.dot(w3, w2)                                   # (C, C)
    b32 = (jnp.dot(w3, b2) + b3).reshape(C, 1)              # (C, 1)

    x = x_nchw.reshape(N, C, HW)        # free reshape: HW is the lane axis
    budget, vmem_limit, multicore = _vmem_budget_and_limit()

    per_image_bytes = C * HW * 4
    # working set ~ x(2 bufs) + out(2 bufs) + t intermediate + slack = 6 slabs
    nb_max = budget // (6 * per_image_bytes)

    use_fused = (nb_max >= 1) and not force_tiled
    if use_fused and multicore and N == 1 and per_image_bytes >= (4 << 20):
        # A single fused grid step would use only one of v7x's two TensorCores;
        # the tiled+parallel path streams HBM on both.
        use_fused = False

    conv_flops = 2 * N * C * C * HW
    io_bytes = 2 * N * C * HW * 4 + (C * C + C + 2 * C * Cr) * 4

    if use_fused:
        # -------- single-pass fused path, batch-blocked --------
        if force_nb is not None:
            nb = int(force_nb)
        else:
            nb = int(min(N, max(1, nb_max)))
            if multicore and N >= 2:
                nb = min(nb, -(-N // 2))    # keep >= 2 grid steps for 2 TCs
        grid_n = pl.cdiv(N, nb)

        out = pl.pallas_call(
            _sam_fused_kernel,
            out_shape=jax.ShapeDtypeStruct((N, C, HW), jnp.float32),
            grid_spec=pltpu.PrefetchScalarGridSpec(
                num_scalar_prefetch=0,
                grid=(grid_n,),
                in_specs=[
                    pl.BlockSpec((nb, C, HW), lambda n: (n, 0, 0)),   # x
                    pl.BlockSpec((C, C), lambda n: (0, 0)),           # folded conv W
                    pl.BlockSpec((C, 1), lambda n: (0, 0)),           # folded conv b
                    pl.BlockSpec((Cr, C), lambda n: (0, 0)),          # CA down W
                    pl.BlockSpec((C, Cr), lambda n: (0, 0)),          # CA up W
                ],
                out_specs=pl.BlockSpec((nb, C, HW), lambda n: (n, 0, 0)),
            ),
            compiler_params=pltpu.CompilerParams(
                dimension_semantics=("parallel",),
                vmem_limit_bytes=vmem_limit),
            cost_estimate=pl.CostEstimate(
                flops=conv_flops,
                transcendentals=N * C,
                bytes_accessed=io_bytes),
        )(x, w32, b32, wd1, wd2)
        return out.reshape(N, C, H, W)

    # ---------- two-pass tiled path (bounds VMEM per grid step) ------------
    hw_tile = force_hw_tile
    if hw_tile is None:
        max_by_budget = max(128, (budget // (6 * C * 4)) // 128 * 128)
        hw_tile = min(_round_up(HW, 128), max_by_budget)
        if multicore and N == 1:
            # ensure >= 2 tiles so both TensorCores get work
            hw_tile = min(hw_tile, max(128, _round_up(-(-HW // 2), 128)))
    n_tiles = pl.cdiv(HW, hw_tile)

    # Pass 1: pure-bandwidth spatial partial sums of x (pool linearity:
    # mean(W32 @ x + b32) == W32 @ mean(x) + b32).
    psum = pl.pallas_call(
        functools.partial(_sam_pool_kernel, HW, hw_tile),
        out_shape=jax.ShapeDtypeStruct((N, n_tiles, C, 1), jnp.float32),
        grid_spec=pltpu.PrefetchScalarGridSpec(
            num_scalar_prefetch=0,
            grid=(N, n_tiles),
            in_specs=[pl.BlockSpec((1, C, hw_tile), lambda n, j: (n, 0, j))],
            out_specs=pl.BlockSpec((1, 1, C, 1), lambda n, j: (n, j, 0, 0)),
        ),
        compiler_params=pltpu.CompilerParams(
            dimension_semantics=("parallel", "parallel"),
            vmem_limit_bytes=vmem_limit),
        cost_estimate=pl.CostEstimate(
            flops=N * C * HW,
            transcendentals=0,
            bytes_accessed=N * C * HW * 4),
    )(x)

    # Tiny (N, C, 1) math: folded conv on pooled vector + CA MLP, plain jnp.
    pooled_x = jnp.sum(psum, axis=1) / float(HW)                      # (N, C, 1)
    pooled_t = jnp.einsum("oc,ncl->nol", w32, pooled_x) + b32[None]   # (N, C, 1)
    h = jnp.maximum(jnp.einsum("rc,ncl->nrl", wd1, pooled_t), 0.0)
    y = jax.nn.sigmoid(jnp.einsum("cr,nrl->ncl", wd2, h))             # (N, C, 1)

    # Pass 2: recompute folded conv per tile and apply the channel gate.
    out = pl.pallas_call(
        _sam_gate_kernel,
        out_shape=jax.ShapeDtypeStruct((N, C, HW), jnp.float32),
        grid_spec=pltpu.PrefetchScalarGridSpec(
            num_scalar_prefetch=0,
            grid=(N, n_tiles),
            in_specs=[
                pl.BlockSpec((1, C, hw_tile), lambda n, j: (n, 0, j)),
                pl.BlockSpec((C, C), lambda n, j: (0, 0)),
                pl.BlockSpec((C, 1), lambda n, j: (0, 0)),
                pl.BlockSpec((1, C, 1), lambda n, j: (n, 0, 0)),      # gate y
            ],
            out_specs=pl.BlockSpec((1, C, hw_tile), lambda n, j: (n, 0, j)),
        ),
        compiler_params=pltpu.CompilerParams(
            dimension_semantics=("parallel", "parallel"),
            vmem_limit_bytes=vmem_limit),
        cost_estimate=pl.CostEstimate(
            flops=conv_flops,
            transcendentals=0,
            bytes_accessed=io_bytes),
    )(x, w32, b32, y)

    return out.reshape(N, C, H, W)


# ---------------------------------------------------------------------------
# Reference + test harness
# ---------------------------------------------------------------------------

def _reference(x_nchw, params):
    """Plain-JAX reference of the same math (unfolded, like the PyTorch module)."""
    w2, b2, w3, b3, wd1, wd2 = params
    N, C, H, W = x_nchw.shape
    x = x_nchw.reshape(N, C, H * W)
    img = jnp.einsum("oc,ncl->nol", w2, x) + b2[None, :, None]
    t = jnp.einsum("oc,ncl->nol", w3, img) + b3[None, :, None]
    pooled = jnp.mean(t, axis=2, keepdims=True)
    h = jnp.maximum(jnp.einsum("rc,ncl->nrl", wd1, pooled), 0.0)
    y = jax.nn.sigmoid(jnp.einsum("cr,nrl->ncl", wd2, h))
    return (t * y).reshape(N, C, H, W)


def make_params(key, in_c):
    """Deterministic synthetic parameters (shapes as in SAM.__init__)."""
    red = 8
    ks = jax.random.split(key, 6)
    scale = 0.1
    w2 = scale * jax.random.normal(ks[0], (in_c, in_c), jnp.float32)          # conv2 1x1
    b2 = scale * jax.random.normal(ks[1], (in_c,), jnp.float32)
    w3 = scale * jax.random.normal(ks[2], (in_c, in_c), jnp.float32)          # conv3 1x1
    b3 = scale * jax.random.normal(ks[3], (in_c,), jnp.float32)
    wd1 = scale * jax.random.normal(ks[4], (in_c // red, in_c), jnp.float32)  # CA down
    wd2 = scale * jax.random.normal(ks[5], (in_c, in_c // red), jnp.float32)  # CA up
    # TODO(synk): conv1 (3x3) is initialized in the PyTorch module but unused in forward(); omitted.
    return (w2, b2, w3, b3, wd1, wd2)


if __name__ == "__main__":
    key = jax.random.PRNGKey(0)
    k_x, k_p, k_x2, k_x3 = jax.random.split(key, 4)

    N, C, H, W = 2, 16, 16, 16     # in_c=16 so the CA bottleneck is 16 // 8 = 2
    x = jax.random.normal(k_x, (N, C, H, W), jnp.float32)
    params = make_params(k_p, C)
    ref = _reference(x, params)

    # 1) Fused single-pass path (auto-selected at this size).
    out = jax.block_until_ready(sam_forward(x, params))
    assert out.shape == (N, C, H, W)
    assert jnp.allclose(out, ref, atol=3e-5, rtol=3e-5), "fused path mismatch"

    # 2) Two-pass HW-tiled path (used for large images; forced here), HW % tile == 0.
    out_t = jax.block_until_ready(
        sam_forward(x, params, force_tiled=True, force_hw_tile=128))
    assert jnp.allclose(out_t, ref, atol=3e-5, rtol=3e-5), "tiled path mismatch"

    # 3) Tiled path with HW not a multiple of the tile (masked last tile).
    x2 = jax.random.normal(k_x2, (1, C, 12, 12), jnp.float32)   # HW = 144
    ref2 = _reference(x2, params)
    out2 = jax.block_until_ready(
        sam_forward(x2, params, force_tiled=True, force_hw_tile=128))
    assert jnp.allclose(out2, ref2, atol=3e-5, rtol=3e-5), "masked tile mismatch"
    out2f = jax.block_until_ready(sam_forward(x2, params))      # fused, odd HW
    assert jnp.allclose(out2f, ref2, atol=3e-5, rtol=3e-5), "fused odd-HW mismatch"

    # 4) Fused path with batch blocking where Nb does not divide N (padded block).
    x3 = jax.random.normal(k_x3, (3, C, 8, 8), jnp.float32)
    ref3 = _reference(x3, params)
    out3 = jax.block_until_ready(sam_forward(x3, params, force_nb=2))
    assert jnp.allclose(out3, ref3, atol=3e-5, rtol=3e-5), "batch-blocked mismatch"

    print("KERNEL_OK")
</pallas_src>

<mosaic_0001>
module attributes {stable_mosaic.version = 11 : i64} {
  func.func @_sam_fused_kernel(%arg0: i32, %arg1: memref<1x16x256xf32, #tpu.memory_space<vmem>>, %arg2: memref<16x16xf32, #tpu.memory_space<vmem>>, %arg3: memref<16x1xf32, #tpu.memory_space<vmem>>, %arg4: memref<2x16xf32, #tpu.memory_space<vmem>>, %arg5: memref<16x2xf32, #tpu.memory_space<vmem>>, %arg6: memref<1x16x256xf32, #tpu.memory_space<vmem>>) attributes {dimension_semantics = [#tpu.dimension_semantics<parallel>], iteration_bounds = array<i64: 2>, scalar_prefetch = 0 : i64, scratch_operands = 0 : i64, tpu.core_type = #tpu.core_type<tc>, window_params = [{transform_indices = @transform_0, window_bounds = array<i64: 1, 16, 256>}, {pipeline_mode = #tpu.pipeline_mode<synchronous>, transform_indices = @transform_1, window_bounds = array<i64: 16, 16>}, {pipeline_mode = #tpu.pipeline_mode<synchronous>, transform_indices = @transform_2, window_bounds = array<i64: 16, 1>}, {pipeline_mode = #tpu.pipeline_mode<synchronous>, transform_indices = @transform_3, window_bounds = array<i64: 2, 16>}, {pipeline_mode = #tpu.pipeline_mode<synchronous>, transform_indices = @transform_4, window_bounds = array<i64: 16, 2>}, {transform_indices = @transform_5, window_bounds = array<i64: 1, 16, 256>}]} {
    %c0 = arith.constant 0 : index
    %c0_0 = arith.constant 0 : index
    %c0_1 = arith.constant 0 : index
    %0 = vector.load %arg1[%c0, %c0_0, %c0_1] : memref<1x16x256xf32, #tpu.memory_space<vmem>>, vector<1x16x256xf32>
    %c0_2 = arith.constant 0 : index
    %c0_3 = arith.constant 0 : index
    %1 = vector.load %arg2[%c0_2, %c0_3] : memref<16x16xf32, #tpu.memory_space<vmem>>, vector<16x16xf32>
    "tpu.trace_start"() <{level = 10 : i32, message = "oc,bcl->bol"}> : () -> ()
    %cst = arith.constant dense<0.000000e+00> : vector<1x256x16xf32>
    %2 = tpu.matmul %0, %1, %cst {dimension_numbers = #tpu.dot_dimension_numbers<[1], [1], [0, 2], [0], [0, 0, 0, 2, 1, 0], [], []>} : vector<1x16x256xf32>, vector<16x16xf32>, vector<1x256x16xf32> -> vector<1x256x16xf32>
    %3 = tpu.transpose %2, [0, 2, 1] : vector<1x256x16xf32> -> vector<1x16x256xf32>
    "tpu.trace_stop"() : () -> ()
    %c0_4 = arith.constant 0 : index
    %c0_5 = arith.constant 0 : index
    %4 = vector.load %arg3[%c0_4, %c0_5] : memref<16x1xf32, #tpu.memory_space<vmem>>, vector<16x1xf32>
    %5 = vector.shape_cast %4 : vector<16x1xf32> to vector<1x16x1xf32>
    %6 = vector.broadcast %5 : vector<1x16x1xf32> to vector<1x16x256xf32>
    %7 = arith.addf %3, %6 : vector<1x16x256xf32>
    %cst_6 = arith.constant dense<0.000000e+00> : vector<1x16xf32>
    %8 = vector.multi_reduction <add>, %7, %cst_6 [2] : vector<1x16x256xf32> to vector<1x16xf32>
    %9 = vector.shape_cast %8 : vector<1x16xf32> to vector<1x16x1xf32>
    %cst_7 = arith.constant 2.560000e+02 : f32
    %10 = vector.broadcast %cst_7 : f32 to vector<1x16x1xf32>
    %11 = arith.divf %9, %10 : vector<1x16x1xf32>
    %c0_8 = arith.constant 0 : index
    %c0_9 = arith.constant 0 : index
    %12 = vector.load %arg4[%c0_8, %c0_9] : memref<2x16xf32, #tpu.memory_space<vmem>>, vector<2x16xf32>
    "tpu.trace_start"() <{level = 10 : i32, message = "rc,bcl->brl"}> : () -> ()
    %cst_10 = arith.constant dense<0.000000e+00> : vector<1x1x2xf32>
    %13 = tpu.matmul %11, %12, %cst_10 {dimension_numbers = #tpu.dot_dimension_numbers<[1], [1], [0, 2], [0], [0, 0, 0, 2, 1, 0], [], []>} : vector<1x16x1xf32>, vector<2x16xf32>, vector<1x1x2xf32> -> vector<1x1x2xf32>
    %14 = tpu.transpose %13, [0, 2, 1] : vector<1x1x2xf32> -> vector<1x2x1xf32>
    "tpu.trace_stop"() : () -> ()
    %cst_11 = arith.constant 0.000000e+00 : f32
    %15 = vector.broadcast %cst_11 : f32 to vector<1x2x1xf32>
    %16 = arith.maximumf %14, %15 : vector<1x2x1xf32>
    %c0_12 = arith.constant 0 : index
    %c0_13 = arith.constant 0 : index
    %17 = vector.load %arg5[%c0_12, %c0_13] : memref<16x2xf32, #tpu.memory_space<vmem>>, vector<16x2xf32>
    "tpu.trace_start"() <{level = 10 : i32, message = "cr,brl->bcl"}> : () -> ()
    %cst_14 = arith.constant dense<0.000000e+00> : vector<1x1x16xf32>
    %18 = tpu.matmul %16, %17, %cst_14 {dimension_numbers = #tpu.dot_dimension_numbers<[1], [1], [0, 2], [0], [0, 0, 0, 2, 1, 0], [], []>} : vector<1x2x1xf32>, vector<16x2xf32>, vector<1x1x16xf32> -> vector<1x1x16xf32>
    %19 = tpu.transpose %18, [0, 2, 1] : vector<1x1x16xf32> -> vector<1x16x1xf32>
    "tpu.trace_stop"() : () -> ()
    %20 = arith.negf %19 : vector<1x16x1xf32>
    %21 = math.exp %20 : vector<1x16x1xf32>
    %cst_15 = arith.constant 1.000000e+00 : f32
    %22 = vector.broadcast %cst_15 : f32 to vector<1x16x1xf32>
    %23 = arith.addf %22, %21 : vector<1x16x1xf32>
    %24 = arith.divf %22, %23 : vector<1x16x1xf32>
    %25 = vector.broadcast %24 : vector<1x16x1xf32> to vector<1x16x256xf32>
    %26 = arith.mulf %7, %25 : vector<1x16x256xf32>
    %c0_16 = arith.constant 0 : index
    %c0_17 = arith.constant 0 : index
    %c0_18 = arith.constant 0 : index
    %27 = vector.load %arg6[%c0_16, %c0_17, %c0_18] : memref<1x16x256xf32, #tpu.memory_space<vmem>>, vector<1x16x256xf32>
    tpu.vector_store %arg6[%c0_16, %c0_17, %c0_18], %26 {strides = array<i32>} : memref<1x16x256xf32, #tpu.memory_space<vmem>>, vector<1x16x256xf32>,
    return
  }
  func.func @transform_0(%arg0: i32) -> (i32, i32, i32) {
    %c0_i32 = arith.constant 0 : i32
    %c0_i32_0 = arith.constant 0 : i32
    %c0_i32_1 = arith.constant 0 : i32
    return %arg0, %c0_i32, %c0_i32_0 : i32, i32, i32
  }
  func.func @transform_1(%arg0: i32) -> (i32, i32) {
    %c0_i32 = arith.constant 0 : i32
    %c0_i32_0 = arith.constant 0 : i32
    %c0_i32_1 = arith.constant 0 : i32
    return %c0_i32, %c0_i32_0 : i32, i32
  }
  func.func @transform_2(%arg0: i32) -> (i32, i32) {
    %c0_i32 = arith.constant 0 : i32
    %c0_i32_0 = arith.constant 0 : i32
    %c0_i32_1 = arith.constant 0 : i32
    return %c0_i32, %c0_i32_0 : i32, i32
  }
  func.func @transform_3(%arg0: i32) -> (i32, i32) {
    %c0_i32 = arith.constant 0 : i32
    %c0_i32_0 = arith.constant 0 : i32
    %c0_i32_1 = arith.constant 0 : i32
    return %c0_i32, %c0_i32_0 : i32, i32
  }
  func.func @transform_4(%arg0: i32) -> (i32, i32) {
    %c0_i32 = arith.constant 0 : i32
    %c0_i32_0 = arith.constant 0 : i32
    %c0_i32_1 = arith.constant 0 : i32
    return %c0_i32, %c0_i32_0 : i32, i32
  }
  func.func @transform_5(%arg0: i32) -> (i32, i32, i32) {
    %c0_i32 = arith.constant 0 : i32
    %c0_i32_0 = arith.constant 0 : i32
    %c0_i32_1 = arith.constant 0 : i32
    return %arg0, %c0_i32, %c0_i32_0 : i32, i32, i32
  }
}

</mosaic_0001>

<llo_original>
// kernel: tpu_custom_call.1
$region0: #{tpu_custom_call.1}
  #allocation0 [shape = 'u32[]', space=smem, size = 0x4, offset = 0x4, fixed_abs, tag = 'smem constant byte address 0x4 - core index']
  #allocation1 [shape = 'u32[72,128]{1,0:T(1,128)}', space=vmem, size = 0x9000, scoped, tag = 'internal scratch']
  %s0 = inlined_call_operand.hbm [shape: f32[2,16,256], index: 0, kind: input, shape index: {}]
  %s1 = inlined_call_operand.vmem [shape: f32[16,16], index: 1, kind: input, shape index: {}]
  %s2 = inlined_call_operand.vmem [shape: f32[16,1], index: 2, kind: input, shape index: {}]
  %s3 = inlined_call_operand.vmem [shape: f32[2,16], index: 3, kind: input, shape index: {}]
  %s4 = inlined_call_operand.vmem [shape: f32[16,2], index: 4, kind: input, shape index: {}]
  %s5 = inlined_call_operand.hbm [shape: f32[2,16,256], index: 5, kind: output, shape index: {}]
  %s6 = sld [smem:[#allocation0]]
  $region57: #{tpu_custom_call.1} parent=0
    _
  %s8 = ssub.s32 1, %s6
  %s9 = scalar_select 0, %s8, %s6
  $region1: #{tpu_custom_call.1} parent=0
    #allocation2 [shape = 'u8[32768]{0}', space=vmem, size = 0x8000, scoped, tag = 'input window, operand 0']
    #allocation3 [shape = 's32[2]{0}', space=sflag, size = 0x8, scoped, tag = 'scoped memory for tpu_custom_call.1']
    #allocation4 [shape = 's32[2]{0}', space=sflag, size = 0x8, scoped, tag = 'scoped memory for tpu_custom_call.1']
    #allocation5 [shape = 'u8[32768]{0}', space=vmem, size = 0x8000, scoped, tag = 'output window, operand 0']
    %10 = vsyncpa [#allocation3], 0
    %s11 = scalar_lea.sflag [#allocation3], 1
    %12 = vsyncpa %s11, 0
    %13 = vsyncpa [#allocation4], 0
    %s14 = scalar_lea.sflag [#allocation4], 1
    %15 = vsyncpa %s14, 0
    loop: start=0, step=1, limit=4
    $region2: #{tpu_custom_call.1} parent=1 // loop_pre_header
      _
    $region3: #{tpu_custom_call.1} parent=1 // loop_header
      %s17 = sphi 0, %s21
      %p18 = scmp.ge.s32.totalorder %s17, 4
      %s27 = sphi 0, %s29
      %s30 = sphi 0, %s27
      %s31 = sphi 0, %s30
      %s47 = sphi 0, %s31
      %s51 = sphi 0, %s51
      %s53 = sphi 0, %s51
      %s54 = sphi 0, %s53
      %s68 = sphi 0, %s54
      %s72 = sphi 0, %s72
      %s74 = sphi 0, %s72
      %s75 = sphi 0, %s74
      %s89 = sphi 0, %s75
      %s93 = sphi 0, %s93
      %s95 = sphi 0, %s93
      %s96 = sphi 0, %s95
      %s110 = sphi 0, %s96
      %s114 = sphi 0, %s114
      %s116 = sphi 0, %s114
      %s117 = sphi 0, %s116
      %s131 = sphi 0, %s117
      %s137 = sphi 0, %s139
      %s140 = sphi 0, %s137
      %s141 = sphi 0, %s140
      %s157 = sphi 0, %s141
    $region4: #{tpu_custom_call.1} parent=1 // loop_header_branch
      %20 = sbr.rel (%p18) target = $region8
    $region5: #{tpu_custom_call.1} parent=1 // loop_body
      %s22 = ssub.s32 %s17, 1
      %s23 = ssub.s32 %s17, 2
      %s24 = sadd.s32 %s17, 1
      %s25 = ssub.s32 %s17, %s24
      %p26 = scmp.eq.s32.totalorder %s25, 0
      %s28 = sadd.s32 %s27, 1
      %s29 = scalar_select %p26, %s27, %s28
      %p32 = pneg %p26
      %p33 = scmp.eq.s32.totalorder %s17, 1
      %p34 = por %p32, %p33
      %p35 = scmp.ne.s32.totalorder %s27, %s30
      %p36 = scmp.eq.s32.totalorder %s17, 0
      %p37 = por %p35, %p36
      %p38 = scmp.ne.s32.totalorder %s27, %s30
      %p39 = scmp.eq.s32.totalorder %s22, 1
      %p40 = por %p38, %p39
      %p41 = scmp.ne.s32.totalorder %s30, %s31
      %p42 = scmp.eq.s32.totalorder %s22, 0
      %p43 = por %p41, %p42
      %p44 = scmp.ne.s32.totalorder %s30, %s31
      %p45 = scmp.eq.s32.totalorder %s23, 1
      %p46 = por %p44, %p45
      %p48 = scmp.ne.s32.totalorder %s31, %s47
      %p49 = scmp.eq.s32.totalorder %s23, 0
      %p50 = por %p48, %p49
      %s52 = sadd.s32 %s51, 1
      %p55 = scmp.eq.s32.totalorder %s17, 1
      %p56 = scmp.ne.s32.totalorder %s51, %s53
      %p57 = scmp.eq.s32.totalorder %s17, 0
      %p58 = por %p56, %p57
      %p59 = scmp.ne.s32.totalorder %s51, %s53
      %p60 = scmp.eq.s32.totalorder %s22, 1
      %p61 = por %p59, %p60
      %p62 = scmp.ne.s32.totalorder %s53, %s54
      %p63 = scmp.eq.s32.totalorder %s22, 0
      %p64 = por %p62, %p63
      %p65 = scmp.ne.s32.totalorder %s53, %s54
      %p66 = scmp.eq.s32.totalorder %s23, 1
      %p67 = por %p65, %p66
      %p69 = scmp.ne.s32.totalorder %s54, %s68
      %p70 = scmp.eq.s32.totalorder %s23, 0
      %p71 = por %p69, %p70
      %s73 = sadd.s32 %s72, 1
      %p76 = scmp.eq.s32.totalorder %s17, 1
      %p77 = scmp.ne.s32.totalorder %s72, %s74
      %p78 = scmp.eq.s32.totalorder %s17, 0
      %p79 = por %p77, %p78
      %p80 = scmp.ne.s32.totalorder %s72, %s74
      %p81 = scmp.eq.s32.totalorder %s22, 1
      %p82 = por %p80, %p81
      %p83 = scmp.ne.s32.totalorder %s74, %s75
      %p84 = scmp.eq.s32.totalorder %s22, 0
      %p85 = por %p83, %p84
      %p86 = scmp.ne.s32.totalorder %s74, %s75
      %p87 = scmp.eq.s32.totalorder %s23, 1
      %p88 = por %p86, %p87
      %p90 = scmp.ne.s32.totalorder %s75, %s89
      %p91 = scmp.eq.s32.totalorder %s23, 0
      %p92 = por %p90, %p91
      %s94 = sadd.s32 %s93, 1
      %p97 = scmp.eq.s32.totalorder %s17, 1
      %p98 = scmp.ne.s32.totalorder %s93, %s95
      %p99 = scmp.eq.s32.totalorder %s17, 0
      %p100 = por %p98, %p99
      %p101 = scmp.ne.s32.totalorder %s93, %s95
      %p102 = scmp.eq.s32.totalorder %s22, 1
      %p103 = por %p101, %p102
      %p104 = scmp.ne.s32.totalorder %s95, %s96
      %p105 = scmp.eq.s32.totalorder %s22, 0
      %p106 = por %p104, %p105
      %p107 = scmp.ne.s32.totalorder %s95, %s96
      %p108 = scmp.eq.s32.totalorder %s23, 1
      %p109 = por %p107, %p108
      %p111 = scmp.ne.s32.totalorder %s96, %s110
      %p112 = scmp.eq.s32.totalorder %s23, 0
      %p113 = por %p111, %p112
      %s115 = sadd.s32 %s114, 1
      %p118 = scmp.eq.s32.totalorder %s17, 1
      %p119 = scmp.ne.s32.totalorder %s114, %s116
      %p120 = scmp.eq.s32.totalorder %s17, 0
      %p121 = por %p119, %p120
      %p122 = scmp.ne.s32.totalorder %s114, %s116
      %p123 = scmp.eq.s32.totalorder %s22, 1
      %p124 = por %p122, %p123
      %p125 = scmp.ne.s32.totalorder %s116, %s117
      %p126 = scmp.eq.s32.totalorder %s22, 0
      %p127 = por %p125, %p126
      %p128 = scmp.ne.s32.totalorder %s116, %s117
      %p129 = scmp.eq.s32.totalorder %s23, 1
      %p130 = por %p128, %p129
      %p132 = scmp.ne.s32.totalorder %s117, %s131
      %p133 = scmp.eq.s32.totalorder %s23, 0
      %p134 = por %p132, %p133
      %s135 = ssub.s32 %s17, %s24
      %p136 = scmp.eq.s32.totalorder %s135, 0
      %s138 = sadd.s32 %s137, 1
      %s139 = scalar_select %p136, %s137, %s138
      %p142 = pneg %p136
      %p143 = scmp.eq.s32.totalorder %s17, 1
      %p144 = por %p142, %p143
      %p145 = scmp.ne.s32.totalorder %s137, %s140
      %p146 = scmp.eq.s32.totalorder %s17, 0
      %p147 = por %p145, %p146
      %p148 = scmp.ne.s32.totalorder %s137, %s140
      %p149 = scmp.eq.s32.totalorder %s22, 1
      %p150 = por %p148, %p149
      %p151 = scmp.ne.s32.totalorder %s140, %s141
      %p152 = scmp.eq.s32.totalorder %s22, 0
      %p153 = por %p151, %p152
      %p154 = scmp.ne.s32.totalorder %s140, %s141
      %p155 = scmp.eq.s32.totalorder %s23, 1
      %p156 = por %p154, %p155
      %p158 = scmp.ne.s32.totalorder %s141, %s157
      %p159 = scmp.eq.s32.totalorder %s23, 0
      %p160 = por %p158, %p159
      %p161 = scmp.le.s32.totalorder 1, %s17
      %p162 = scmp.lt.s32.totalorder %s17, 3
      %p163 = pnand %p161, %p162
      %p164 = pneg %p163
      // Predicated region
      $region9: #{tpu_custom_call.1} parent=5 // pred_check
        _
      $region10: #{tpu_custom_call.1} parent=5 // pred_check_branch
        %166 = sbr.rel (%p163) target = $region12
      $region11: #{tpu_custom_call.1} parent=5 // pred_region
        %s167 = ssub.s32 %s17, 1
        // Predicated region
        $region13: #{tpu_custom_call.1} parent=11 // pred_check
          %p168 = pneg %p64
        $region14: #{tpu_custom_call.1} parent=11 // pred_check_branch
          %170 = sbr.rel (%p168) target = $region16
        $region15: #{tpu_custom_call.1} parent=11 // pred_region
          _
        $region16: #{tpu_custom_call.1} parent=11 // pred_fallthru
          _
        // Predicated region
        $region17: #{tpu_custom_call.1} parent=11 // pred_check
          %p171 = pneg %p85
        $region18: #{tpu_custom_call.1} parent=11 // pred_check_branch
          %173 = sbr.rel (%p171) target = $region20
        $region19: #{tpu_custom_call.1} parent=11 // pred_region
          _
        $region20: #{tpu_custom_call.1} parent=11 // pred_fallthru
          _
        // Predicated region
        $region21: #{tpu_custom_call.1} parent=11 // pred_check
          %p174 = pneg %p106
        $region22: #{tpu_custom_call.1} parent=11 // pred_check_branch
          %176 = sbr.rel (%p174) target = $region24
        $region23: #{tpu_custom_call.1} parent=11 // pred_region
          _
        $region24: #{tpu_custom_call.1} parent=11 // pred_fallthru
          _
        // Predicated region
        $region25: #{tpu_custom_call.1} parent=11 // pred_check
          %p177 = pneg %p127
        $region26: #{tpu_custom_call.1} parent=11 // pred_check_branch
          %179 = sbr.rel (%p177) target = $region28
        $region27: #{tpu_custom_call.1} parent=11 // pred_region
          _
        $region28: #{tpu_custom_call.1} parent=11 // pred_fallthru
          _
      $region12: #{tpu_custom_call.1} parent=5 // pred_fallthru
        _
      %p180 = scmp.lt.s32.totalorder %s17, 2
      // Predicated region
      $region29: #{tpu_custom_call.1} parent=5 // pred_check
        %p181 = pneg %p180
      $region30: #{tpu_custom_call.1} parent=5 // pred_check_branch
        %183 = sbr.rel (%p181) target = $region32
      $region31: #{tpu_custom_call.1} parent=5 // pred_region
        // Predicated region
        $region33: #{tpu_custom_call.1} parent=31 // pred_check
          %p184 = pneg %p37
        $region34: #{tpu_custom_call.1} parent=31 // pred_check_branch
          %186 = sbr.rel (%p184) target = $region36
        $region35: #{tpu_custom_call.1} parent=31 // pred_region
          %s187 = sand.u32 %s27, 1
          %s188 = scalar_lea.sflag [#allocation3], %s187
          %s189 = sand.u32 %s27, 1
          %s190 = smul.addr %s189, 32
          %s191 = scalar_lea.vmem [#allocation2], %s190
          %193 = vsyncadd %s188, 0
          %s194 = smul.addr %s17, 4
          %s195 = smul.addr %s194, 8
          %s196 = scalar_lea.hbm %s0, %s195
          %s197 = sshll.u32 %s196, 4
          %s198 = int_to_ptr.hbm [resolvable:$true] %s197
          %s199 = sshll.u32 %s191, 4
          %s200 = int_to_ptr.vmem [resolvable:$true] %s199
          %205 = dma.hbm_to_vmem [thread:$0]  %s198, 512, %s200, %s188, 256, 256, 16
        $region36: #{tpu_custom_call.1} parent=31 // pred_fallthru
          _
      $region32: #{tpu_custom_call.1} parent=5 // pred_fallthru
        _
      %p206 = scmp.le.s32.totalorder 1, %s17
      %p207 = scmp.lt.s32.totalorder %s17, 3
      %p208 = pnand %p206, %p207
      %p209 = pneg %p208
      // Predicated region
      $region37: #{tpu_custom_call.1} parent=5 // pred_check
        _
      $region38: #{tpu_custom_call.1} parent=5 // pred_check_branch
        %211 = sbr.rel (%p208) target = $region40
      $region39: #{tpu_custom_call.1} parent=5 // pred_region
        %s212 = ssub.s32 %s17, 1
        %s213 = sand.u32 %s30, 1
        %s214 = scalar_lea.sflag [#allocation3], %s213
        %s215 = sand.u32 %s30, 1
        %s216 = smul.addr %s215, 32
        %s217 = scalar_lea.vmem [#allocation2], %s216
        // Predicated region
        $region41: #{tpu_custom_call.1} parent=39 // pred_check
          %p218 = pneg %p43
        $region42: #{tpu_custom_call.1} parent=39 // pred_check_branch
          %220 = sbr.rel (%p218) target = $region44
        $region43: #{tpu_custom_call.1} parent=39 // pred_region
          %222 = dma.done %s214, 512
        $region44: #{tpu_custom_call.1} parent=39 // pred_fallthru
          _
        %s223 = sand.u32 %s30, 1
        %s224 = scalar_lea.sflag [#allocation3], %s223
        %s225 = sand.u32 %s30, 1
        %s226 = smul.addr %s225, 32
        %s227 = scalar_lea.vmem [#allocation2], %s226
        %p228 = pneg %p43
        %p229 = pneg %p40
        %p230 = pneg %p64
        %p231 = pneg %p61
        %p232 = pneg %p85
        %p233 = pneg %p82
        %p234 = pneg %p106
        %p235 = pneg %p103
        %p236 = pneg %p127
        %p237 = pneg %p124
        %p238 = pneg %p153
        %p239 = pneg %p150
        %s240 = sand.u32 %s140, 1
        %s241 = scalar_lea.sflag [#allocation4], %s240
        %s242 = sand.u32 %s140, 1
        %s243 = smul.addr %s242, 32
        %s244 = scalar_lea.vmem [#allocation5], %s243
        %v245 = vld [vmem:[%s217] sm:$0xff]
        %v246 = vld [vmem:[%s217 + $0x8] sm:$0xff]
        %v247 = vld [vmem:[%s217 + $0x10] sm:$0xff]
        %v248 = vld [vmem:[%s217 + $0x18] sm:$0xff]
        %v249 = vld [vmem:[%s1] sm:$0xff]
        %v250 = vld [vmem:[%s1 + $0x8] sm:$0xff]
        %251 = vxpose.xlu0.b32.start [1/16] %v245, 128
        %252 = vxpose.xlu0.b32.cont [2/16] %v247, 128
        %253 = vxpose.xlu0.b32.cont [3/16] 0.0, 128
        %254 = vxpose.xlu0.b32.cont [4/16] 0.0, 128
        %255 = vxpose.xlu0.b32.cont [5/16] 0.0, 128
        %256 = vxpose.xlu0.b32.cont [6/16] 0.0, 128
        %257 = vxpose.xlu0.b32.cont [7/16] 0.0, 128
        %258 = vxpose.xlu0.b32.cont [8/16] 0.0, 128
        %259 = vxpose.xlu0.b32.cont [9/16] 0.0, 128
        %260 = vxpose.xlu0.b32.cont [10/16] 0.0, 128
        %261 = vxpose.xlu0.b32.cont [11/16] 0.0, 128
        %262 = vxpose.xlu0.b32.cont [12/16] 0.0, 128
        %263 = vxpose.xlu0.b32.cont [13/16] 0.0, 128
        %264 = vxpose.xlu0.b32.cont [14/16] 0.0, 128
        %265 = vxpose.xlu0.b32.cont [15/16] 0.0, 128
        %266 = vxpose.xlu0.b32.end [16/16] 0.0, 128
        %v267 = vpop.trf.xlu0
        %v268 = vpop.trf.xlu0
        %v269 = vpop.trf.xlu0
        %v270 = vpop.trf.xlu0
        %v271 = vpop.trf.xlu0
        %v272 = vpop.trf.xlu0
        %v273 = vpop.trf.xlu0
        %v274 = vpop.trf.xlu0
        %v275 = vpop.trf.xlu0
        %v276 = vpop.trf.xlu0
        %v277 = vpop.trf.xlu0
        %v278 = vpop.trf.xlu0
        %v279 = vpop.trf.xlu0
        %v280 = vpop.trf.xlu0
        %v281 = vpop.trf.xlu0
        %v282 = vpop.trf.xlu0
        %283 = vxpose.xlu0.b32.start [1/16] %v246, 128
        %284 = vxpose.xlu0.b32.cont [2/16] %v248, 128
        %285 = vxpose.xlu0.b32.cont [3/16] 0.0, 128
        %286 = vxpose.xlu0.b32.cont [4/16] 0.0, 128
        %287 = vxpose.xlu0.b32.cont [5/16] 0.0, 128
        %288 = vxpose.xlu0.b32.cont [6/16] 0.0, 128
        %289 = vxpose.xlu0.b32.cont [7/16] 0.0, 128
        %290 = vxpose.xlu0.b32.cont [8/16] 0.0, 128
        %291 = vxpose.xlu0.b32.cont [9/16] 0.0, 128
        %292 = vxpose.xlu0.b32.cont [10/16] 0.0, 128
        %293 = vxpose.xlu0.b32.cont [11/16] 0.0, 128
        %294 = vxpose.xlu0.b32.cont [12/16] 0.0, 128
        %295 = vxpose.xlu0.b32.cont [13/16] 0.0, 128
        %296 = vxpose.xlu0.b32.cont [14/16] 0.0, 128
        %297 = vxpose.xlu0.b32.cont [15/16] 0.0, 128
        %298 = vxpose.xlu0.b32.end [16/16] 0.0, 128
        %v299 = vpop.trf.xlu0
        %v300 = vpop.trf.xlu0
        %v301 = vpop.trf.xlu0
        %v302 = vpop.trf.xlu0
        %v303 = vpop.trf.xlu0
        %v304 = vpop.trf.xlu0
        %v305 = vpop.trf.xlu0
        %v306 = vpop.trf.xlu0
        %v307 = vpop.trf.xlu0
        %v308 = vpop.trf.xlu0
        %v309 = vpop.trf.xlu0
        %v310 = vpop.trf.xlu0
        %v311 = vpop.trf.xlu0
        %v312 = vpop.trf.xlu0
        %v313 = vpop.trf.xlu0
        %v314 = vpop.trf.xlu0
        %vm315 = vcmask 130048
        %v317 = vsel %vm315, %v267, 0
        %v320 = vsel %vm315, %v268, 0
        %v323 = vsel %vm315, %v269, 0
        %v326 = vsel %vm315, %v270, 0
        %v329 = vsel %vm315, %v271, 0
        %v332 = vsel %vm315, %v272, 0
        %v335 = vsel %vm315, %v273, 0
        %v338 = vsel %vm315, %v274, 0
        %v341 = vsel %vm315, %v275, 0
        %v344 = vsel %vm315, %v276, 0
        %v347 = vsel %vm315, %v277, 0
        %v350 = vsel %vm315, %v278, 0
        %v353 = vsel %vm315, %v279, 0
        %v356 = vsel %vm315, %v280, 0
        %v359 = vsel %vm315, %v281, 0
        %v362 = vsel %vm315, %v282, 0
        %v365 = vsel %vm315, %v299, 0
        %v368 = vsel %vm315, %v300, 0
        %v371 = vsel %vm315, %v301, 0
        %v374 = vsel %vm315, %v302, 0
        %v377 = vsel %vm315, %v303, 0
        %v380 = vsel %vm315, %v304, 0
        %v383 = vsel %vm315, %v305, 0
        %v386 = vsel %vm315, %v306, 0
        %v389 = vsel %vm315, %v307, 0
        %v392 = vsel %vm315, %v308, 0
        %v395 = vsel %vm315, %v309, 0
        %v398 = vsel %vm315, %v310, 0
        %v401 = vsel %vm315, %v311, 0
        %v404 = vsel %vm315, %v312, 0
        %v407 = vsel %vm315, %v313, 0
        %v410 = vsel %vm315, %v314, 0
        %v413 = vsel %vm315, %v249, 0
        %v416 = vsel %vm315, %v250, 0
        %418 = vmatpush.xpose.msra.mxu0 0.0
        %419 = vmatpush.xpose.msra.mxu0 0.0
        %420 = vmatpush.xpose.msra.mxu0 0.0
        %421 = vmatpush.xpose.msra.mxu0 0.0
        %422 = vmatpush.xpose.msra.mxu0 0.0
        %423 = vmatpush.xpose.msra.mxu0 0.0
        %424 = vmatpush.xpose.msra.mxu0 0.0
        %425 = vmatpush.xpose.msra.mxu0 0.0
        %426 = vmatpush.xpose.msra.mxu0 0.0
        %427 = vmatpush.xpose.msra.mxu0 0.0
        %428 = vmatpush.xpose.msra.mxu0 0.0
        %429 = vmatpush.xpose.msra.mxu0 0.0
        %430 = vmatpush.xpose.msra.mxu0 0.0
        %431 = vmatpush.xpose.msra.mxu0 0.0
        %432 = vmatpush.xpose.msra.mxu0 %v416
        %433 = vmatpush.xpose.msra.mxu0 %v413
        %434 = vmatmul.f32.gmra.mxu0 %v317
        %v435 = vpop.f32.mrf.mxu0
        %v436 = vadd.f32 0.0, %v435
        %437 = vmatmul.f32.gmra.mxu0 %v320
        %v438 = vpop.f32.mrf.mxu0
        %v439 = vadd.f32 0.0, %v438
        %440 = vmatmul.f32.gmra.mxu0 %v323
        %v441 = vpop.f32.mrf.mxu0
        %v442 = vadd.f32 0.0, %v441
        %443 = vmatmul.f32.gmra.mxu0 %v326
        %v444 = vpop.f32.mrf.mxu0
        %v445 = vadd.f32 0.0, %v444
        %446 = vmatmul.f32.gmra.mxu0 %v329
        %v447 = vpop.f32.mrf.mxu0
        %v448 = vadd.f32 0.0, %v447
        %449 = vmatmul.f32.gmra.mxu0 %v332
        %v450 = vpop.f32.mrf.mxu0
        %v451 = vadd.f32 0.0, %v450
        %452 = vmatmul.f32.gmra.mxu0 %v335
        %v453 = vpop.f32.mrf.mxu0
        %v454 = vadd.f32 0.0, %v453
        %455 = vmatmul.f32.gmra.mxu0 %v338
        %v456 = vpop.f32.mrf.mxu0
        %v457 = vadd.f32 0.0, %v456
        %458 = vmatmul.f32.gmra.mxu0 %v341
        %v459 = vpop.f32.mrf.mxu0
        %v460 = vadd.f32 0.0, %v459
        %461 = vmatmul.f32.gmra.mxu0 %v344
        %v462 = vpop.f32.mrf.mxu0
        %v463 = vadd.f32 0.0, %v462
        %464 = vmatmul.f32.gmra.mxu0 %v347
        %v465 = vpop.f32.mrf.mxu0
        %v466 = vadd.f32 0.0, %v465
        %467 = vmatmul.f32.gmra.mxu0 %v350
        %v468 = vpop.f32.mrf.mxu0
        %v469 = vadd.f32 0.0, %v468
        %470 = vmatmul.f32.gmra.mxu0 %v353
        %v471 = vpop.f32.mrf.mxu0
        %v472 = vadd.f32 0.0, %v471
        %473 = vmatmul.f32.gmra.mxu0 %v356
        %v474 = vpop.f32.mrf.mxu0
        %v475 = vadd.f32 0.0, %v474
        %476 = vmatmul.f32.gmra.mxu0 %v359
        %v477 = vpop.f32.mrf.mxu0
        %v478 = vadd.f32 0.0, %v477
        %479 = vmatmul.f32.gmra.mxu0 %v362
        %v480 = vpop.f32.mrf.mxu0
        %v481 = vadd.f32 0.0, %v480
        %482 = vmatmul.f32.gmra.mxu0 %v365
        %v483 = vpop.f32.mrf.mxu0
        %v484 = vadd.f32 0.0, %v483
        %485 = vmatmul.f32.gmra.mxu0 %v368
        %v486 = vpop.f32.mrf.mxu0
        %v487 = vadd.f32 0.0, %v486
        %488 = vmatmul.f32.gmra.mxu0 %v371
        %v489 = vpop.f32.mrf.mxu0
        %v490 = vadd.f32 0.0, %v489
        %491 = vmatmul.f32.gmra.mxu0 %v374
        %v492 = vpop.f32.mrf.mxu0
        %v493 = vadd.f32 0.0, %v492
        %494 = vmatmul.f32.gmra.mxu0 %v377
        %v495 = vpop.f32.mrf.mxu0
        %v496 = vadd.f32 0.0, %v495
        %497 = vmatmul.f32.gmra.mxu0 %v380
        %v498 = vpop.f32.mrf.mxu0
        %v499 = vadd.f32 0.0, %v498
        %500 = vmatmul.f32.gmra.mxu0 %v383
        %v501 = vpop.f32.mrf.mxu0
        %v502 = vadd.f32 0.0, %v501
        %503 = vmatmul.f32.gmra.mxu0 %v386
        %v504 = vpop.f32.mrf.mxu0
        %v505 = vadd.f32 0.0, %v504
        %506 = vmatmul.f32.gmra.mxu0 %v389
        %v507 = vpop.f32.mrf.mxu0
        %v508 = vadd.f32 0.0, %v507
        %509 = vmatmul.f32.gmra.mxu0 %v392
        %v510 = vpop.f32.mrf.mxu0
        %v511 = vadd.f32 0.0, %v510
        %512 = vmatmul.f32.gmra.mxu0 %v395
        %v513 = vpop.f32.mrf.mxu0
        %v514 = vadd.f32 0.0, %v513
        %515 = vmatmul.f32.gmra.mxu0 %v398
        %v516 = vpop.f32.mrf.mxu0
        %v517 = vadd.f32 0.0, %v516
        %518 = vmatmul.f32.gmra.mxu0 %v401
        %v519 = vpop.f32.mrf.mxu0
        %v520 = vadd.f32 0.0, %v519
        %521 = vmatmul.f32.gmra.mxu0 %v404
        %v522 = vpop.f32.mrf.mxu0
        %v523 = vadd.f32 0.0, %v522
        %524 = vmatmul.f32.gmra.mxu0 %v407
        %v525 = vpop.f32.mrf.mxu0
        %v526 = vadd.f32 0.0, %v525
        %527 = vmatmul.f32.gmra.mxu0 %v410
        %v528 = vpop.f32.mrf.mxu0
        %v529 = vadd.f32 0.0, %v528
        %530 = vdwg.mxu0
        %531 = vxpose.xlu0.b32.start [1/16] %v436, 128
        %532 = vxpose.xlu0.b32.cont [2/16] %v439, 128
        %533 = vxpose.xlu0.b32.cont [3/16] %v442, 128
        %534 = vxpose.xlu0.b32.cont [4/16] %v445, 128
        %535 = vxpose.xlu0.b32.cont [5/16] %v448, 128
        %536 = vxpose.xlu0.b32.cont [6/16] %v451, 128
        %537 = vxpose.xlu0.b32.cont [7/16] %v454, 128
        %538 = vxpose.xlu0.b32.cont [8/16] %v457, 128
        %539 = vxpose.xlu0.b32.cont [9/16] %v460, 128
        %540 = vxpose.xlu0.b32.cont [10/16] %v463, 128
        %541 = vxpose.xlu0.b32.cont [11/16] %v466, 128
        %542 = vxpose.xlu0.b32.cont [12/16] %v469, 128
        %543 = vxpose.xlu0.b32.cont [13/16] %v472, 128
        %544 = vxpose.xlu0.b32.cont [14/16] %v475, 128
        %545 = vxpose.xlu0.b32.cont [15/16] %v478, 128
        %546 = vxpose.xlu0.b32.end [16/16] %v481, 128
        %v547 = vpop.trf.xlu0
        %v548 = vpop.trf.xlu0
        %v549 = vpop.trf.xlu0
        %v550 = vpop.trf.xlu0
        %v551 = vpop.trf.xlu0
        %v552 = vpop.trf.xlu0
        %v553 = vpop.trf.xlu0
        %v554 = vpop.trf.xlu0
        %v555 = vpop.trf.xlu0
        %v556 = vpop.trf.xlu0
        %v557 = vpop.trf.xlu0
        %v558 = vpop.trf.xlu0
        %v559 = vpop.trf.xlu0
        %v560 = vpop.trf.xlu0
        %v561 = vpop.trf.xlu0
        %v562 = vpop.trf.xlu0
        %563 = vxpose.xlu0.b32.start [1/16] %v484, 128
        %564 = vxpose.xlu0.b32.cont [2/16] %v487, 128
        %565 = vxpose.xlu0.b32.cont [3/16] %v490, 128
        %566 = vxpose.xlu0.b32.cont [4/16] %v493, 128
        %567 = vxpose.xlu0.b32.cont [5/16] %v496, 128
        %568 = vxpose.xlu0.b32.cont [6/16] %v499, 128
        %569 = vxpose.xlu0.b32.cont [7/16] %v502, 128
        %570 = vxpose.xlu0.b32.cont [8/16] %v505, 128
        %571 = vxpose.xlu0.b32.cont [9/16] %v508, 128
        %572 = vxpose.xlu0.b32.cont [10/16] %v511, 128
        %573 = vxpose.xlu0.b32.cont [11/16] %v514, 128
        %574 = vxpose.xlu0.b32.cont [12/16] %v517, 128
        %575 = vxpose.xlu0.b32.cont [13/16] %v520, 128
        %576 = vxpose.xlu0.b32.cont [14/16] %v523, 128
        %577 = vxpose.xlu0.b32.cont [15/16] %v526, 128
        %578 = vxpose.xlu0.b32.end [16/16] %v529, 128
        %v579 = vpop.trf.xlu0
        %v580 = vpop.trf.xlu0
        %v581 = vpop.trf.xlu0
        %v582 = vpop.trf.xlu0
        %v583 = vpop.trf.xlu0
        %v584 = vpop.trf.xlu0
        %v585 = vpop.trf.xlu0
        %v586 = vpop.trf.xlu0
        %v587 = vpop.trf.xlu0
        %v588 = vpop.trf.xlu0
        %v589 = vpop.trf.xlu0
        %v590 = vpop.trf.xlu0
        %v591 = vpop.trf.xlu0
        %v592 = vpop.trf.xlu0
        %v593 = vpop.trf.xlu0
        %v594 = vpop.trf.xlu0
        %v595 = vld [vmem:[%s2] sm:$0xff]
        %v596 = vld [vmem:[%s2 + $0x8] sm:$0xff]
        %598 = vset.pattern.permute.xlu0 0
        %599 = vperm.xlu0 %598, %v595
        %v600 = vpop.permute.xlu0 %599
        %603 = vset.pattern.permute.xlu0 0
        %604 = vperm.xlu0 %603, %v596
        %v605 = vpop.permute.xlu0 %604
        %v607 = vadd.f32 %v547, %v600
        %v608 = vadd.f32 %v579, %v600
        %v609 = vadd.f32 %v548, %v605
        %v610 = vadd.f32 %v580, %v605
        %v611 = vadd.f32 %v607, %v608
        %612 = vadd.xlane.f32.xlu0 %v611
        %v613 = vpop.xlane.xlu0 %612
        %v614 = vadd.f32 %v609, %v610
        %615 = vadd.xlane.f32.xlu0 %v614
        %v616 = vpop.xlane.xlu0 %615
        %v617 = vrcp.pop 256.0
        %v618 = vmul.f32 256.0, %v617
        %v619 = vsub.f32 1.0, %v618
        %v620 = vmul.f32 %v617, %v619
        %v621 = vadd.f32 %v617, %v620
        %vm622 = vweird.f32 %v617
        %v623 = vsel %vm622, %v617, %v621
        %v624 = vmul.f32 %v613, %v623
        %v625 = vmul.f32 %v616, %v623
        %v626 = vld [vmem:[%s3] sm:$0x3]
        %627 = vxpose.xlu0.b32.start [1/16] %v624, 128
        %628 = vxpose.xlu0.b32.cont [2/16] %v625, 128
        %629 = vxpose.xlu0.b32.cont [3/16] 0.0, 128
        %630 = vxpose.xlu0.b32.cont [4/16] 0.0, 128
        %631 = vxpose.xlu0.b32.cont [5/16] 0.0, 128
        %632 = vxpose.xlu0.b32.cont [6/16] 0.0, 128
        %633 = vxpose.xlu0.b32.cont [7/16] 0.0, 128
        %634 = vxpose.xlu0.b32.cont [8/16] 0.0, 128
        %635 = vxpose.xlu0.b32.cont [9/16] 0.0, 128
        %636 = vxpose.xlu0.b32.cont [10/16] 0.0, 128
        %637 = vxpose.xlu0.b32.cont [11/16] 0.0, 128
        %638 = vxpose.xlu0.b32.cont [12/16] 0.0, 128
        %639 = vxpose.xlu0.b32.cont [13/16] 0.0, 128
        %640 = vxpose.xlu0.b32.cont [14/16] 0.0, 128
        %641 = vxpose.xlu0.b32.cont [15/16] 0.0, 128
        %642 = vxpose.xlu0.b32.end [16/16] 0.0, 128
        %v643 = vpop.trf.xlu0
        %v644 = vpop.trf.xlu0
        %v645 = vpop.trf.xlu0
        %v646 = vpop.trf.xlu0
        %v647 = vpop.trf.xlu0
        %v648 = vpop.trf.xlu0
        %v649 = vpop.trf.xlu0
        %v650 = vpop.trf.xlu0
        %v651 = vpop.trf.xlu0
        %v652 = vpop.trf.xlu0
        %v653 = vpop.trf.xlu0
        %v654 = vpop.trf.xlu0
        %v655 = vpop.trf.xlu0
        %v656 = vpop.trf.xlu0
        %v657 = vpop.trf.xlu0
        %v658 = vpop.trf.xlu0
        %v660 = vsel %vm315, %v643, 0
        %v663 = vsel %vm315, %v626, 0
        %665 = vmatpush.xpose.msra.mxu0 0.0
        %666 = vmatpush.xpose.msra.mxu0 0.0
        %667 = vmatpush.xpose.msra.mxu0 0.0
        %668 = vmatpush.xpose.msra.mxu0 0.0
        %669 = vmatpush.xpose.msra.mxu0 0.0
        %670 = vmatpush.xpose.msra.mxu0 0.0
        %671 = vmatpush.xpose.msra.mxu0 0.0
        %672 = vmatpush.xpose.msra.mxu0 0.0
        %673 = vmatpush.xpose.msra.mxu0 0.0
        %674 = vmatpush.xpose.msra.mxu0 0.0
        %675 = vmatpush.xpose.msra.mxu0 0.0
        %676 = vmatpush.xpose.msra.mxu0 0.0
        %677 = vmatpush.xpose.msra.mxu0 0.0
        %678 = vmatpush.xpose.msra.mxu0 0.0
        %679 = vmatpush.xpose.msra.mxu0 0.0
        %680 = vmatpush.xpose.msra.mxu0 %v663
        %681 = vmatmul.f32.gmra.mxu0 %v660
        %v682 = vpop.f32.mrf.mxu0
        %v683 = vadd.f32 0.0, %v682
        %684 = vdwg.mxu0
        %685 = vxpose.xlu0.b32.start [1/16] %v683, 128
        %686 = vxpose.xlu0.b32.cont [2/16] 0.0, 128
        %687 = vxpose.xlu0.b32.cont [3/16] 0.0, 128
        %688 = vxpose.xlu0.b32.cont [4/16] 0.0, 128
        %689 = vxpose.xlu0.b32.cont [5/16] 0.0, 128
        %690 = vxpose.xlu0.b32.cont [6/16] 0.0, 128
        %691 = vxpose.xlu0.b32.cont [7/16] 0.0, 128
        %692 = vxpose.xlu0.b32.cont [8/16] 0.0, 128
        %693 = vxpose.xlu0.b32.cont [9/16] 0.0, 128
        %694 = vxpose.xlu0.b32.cont [10/16] 0.0, 128
        %695 = vxpose.xlu0.b32.cont [11/16] 0.0, 128
        %696 = vxpose.xlu0.b32.cont [12/16] 0.0, 128
        %697 = vxpose.xlu0.b32.cont [13/16] 0.0, 128
        %698 = vxpose.xlu0.b32.cont [14/16] 0.0, 128
        %699 = vxpose.xlu0.b32.cont [15/16] 0.0, 128
        %700 = vxpose.xlu0.b32.end [16/16] 0.0, 128
        %v701 = vpop.trf.xlu0
        %v702 = vpop.trf.xlu0
        %v703 = vpop.trf.xlu0
        %v704 = vpop.trf.xlu0
        %v705 = vpop.trf.xlu0
        %v706 = vpop.trf.xlu0
        %v707 = vpop.trf.xlu0
        %v708 = vpop.trf.xlu0
        %v709 = vpop.trf.xlu0
        %v710 = vpop.trf.xlu0
        %v711 = vpop.trf.xlu0
        %v712 = vpop.trf.xlu0
        %v713 = vpop.trf.xlu0
        %v714 = vpop.trf.xlu0
        %v715 = vpop.trf.xlu0
        %v716 = vpop.trf.xlu0
        %v717 = vmax.f32 %v701, 0.0
        %v718 = vld [vmem:[%s4] sm:$0xff]
        %v719 = vld [vmem:[%s4 + $0x8] sm:$0xff]
        %720 = vxpose.xlu0.b32.start [1/16] %v717, 128
        %721 = vxpose.xlu0.b32.cont [2/16] 0.0, 128
        %722 = vxpose.xlu0.b32.cont [3/16] 0.0, 128
        %723 = vxpose.xlu0.b32.cont [4/16] 0.0, 128
        %724 = vxpose.xlu0.b32.cont [5/16] 0.0, 128
        %725 = vxpose.xlu0.b32.cont [6/16] 0.0, 128
        %726 = vxpose.xlu0.b32.cont [7/16] 0.0, 128
        %727 = vxpose.xlu0.b32.cont [8/16] 0.0, 128
        %728 = vxpose.xlu0.b32.cont [9/16] 0.0, 128
        %729 = vxpose.xlu0.b32.cont [10/16] 0.0, 128
        %730 = vxpose.xlu0.b32.cont [11/16] 0.0, 128
        %731 = vxpose.xlu0.b32.cont [12/16] 0.0, 128
        %732 = vxpose.xlu0.b32.cont [13/16] 0.0, 128
        %733 = vxpose.xlu0.b32.cont [14/16] 0.0, 128
        %734 = vxpose.xlu0.b32.cont [15/16] 0.0, 128
        %735 = vxpose.xlu0.b32.end [16/16] 0.0, 128
        %v736 = vpop.trf.xlu0
        %v737 = vpop.trf.xlu0
        %v738 = vpop.trf.xlu0
        %v739 = vpop.trf.xlu0
        %v740 = vpop.trf.xlu0
        %v741 = vpop.trf.xlu0
        %v742 = vpop.trf.xlu0
        %v743 = vpop.trf.xlu0
        %v744 = vpop.trf.xlu0
        %v745 = vpop.trf.xlu0
        %v746 = vpop.trf.xlu0
        %v747 = vpop.trf.xlu0
        %v748 = vpop.trf.xlu0
        %v749 = vpop.trf.xlu0
        %v750 = vpop.trf.xlu0
        %v751 = vpop.trf.xlu0
        %vm752 = vcmask 15360
        %v754 = vsel %vm752, %v736, 0
        %v757 = vsel %vm752, %v718, 0
        %v760 = vsel %vm752, %v719, 0
        %762 = vmatpush.xpose.msra.mxu0 0.0
        %763 = vmatpush.xpose.msra.mxu0 0.0
        %764 = vmatpush.xpose.msra.mxu0 0.0
        %765 = vmatpush.xpose.msra.mxu0 0.0
        %766 = vmatpush.xpose.msra.mxu0 0.0
        %767 = vmatpush.xpose.msra.mxu0 0.0
        %768 = vmatpush.xpose.msra.mxu0 0.0
        %769 = vmatpush.xpose.msra.mxu0 0.0
        %770 = vmatpush.xpose.msra.mxu0 0.0
        %771 = vmatpush.xpose.msra.mxu0 0.0
        %772 = vmatpush.xpose.msra.mxu0 0.0
        %773 = vmatpush.xpose.msra.mxu0 0.0
        %774 = vmatpush.xpose.msra.mxu0 0.0
        %775 = vmatpush.xpose.msra.mxu0 0.0
        %776 = vmatpush.xpose.msra.mxu0 %v760
        %777 = vmatpush.xpose.msra.mxu0 %v757
        %778 = vmatmul.f32.gmra.mxu0 %v754
        %v779 = vpop.f32.mrf.mxu0
        %v780 = vadd.f32 0.0, %v779
        %781 = vdwg.mxu0
        %782 = vxpose.xlu0.b32.start [1/16] %v780, 128
        %783 = vxpose.xlu0.b32.cont [2/16] 0.0, 128
        %784 = vxpose.xlu0.b32.cont [3/16] 0.0, 128
        %785 = vxpose.xlu0.b32.cont [4/16] 0.0, 128
        %786 = vxpose.xlu0.b32.cont [5/16] 0.0, 128
        %787 = vxpose.xlu0.b32.cont [6/16] 0.0, 128
        %788 = vxpose.xlu0.b32.cont [7/16] 0.0, 128
        %789 = vxpose.xlu0.b32.cont [8/16] 0.0, 128
        %790 = vxpose.xlu0.b32.cont [9/16] 0.0, 128
        %791 = vxpose.xlu0.b32.cont [10/16] 0.0, 128
        %792 = vxpose.xlu0.b32.cont [11/16] 0.0, 128
        %793 = vxpose.xlu0.b32.cont [12/16] 0.0, 128
        %794 = vxpose.xlu0.b32.cont [13/16] 0.0, 128
        %795 = vxpose.xlu0.b32.cont [14/16] 0.0, 128
        %796 = vxpose.xlu0.b32.cont [15/16] 0.0, 128
        %797 = vxpose.xlu0.b32.end [16/16] 0.0, 128
        %v798 = vpop.trf.xlu0
        %v799 = vpop.trf.xlu0
        %v800 = vpop.trf.xlu0
        %v801 = vpop.trf.xlu0
        %v802 = vpop.trf.xlu0
        %v803 = vpop.trf.xlu0
        %v804 = vpop.trf.xlu0
        %v805 = vpop.trf.xlu0
        %v806 = vpop.trf.xlu0
        %v807 = vpop.trf.xlu0
        %v808 = vpop.trf.xlu0
        %v809 = vpop.trf.xlu0
        %v810 = vpop.trf.xlu0
        %v811 = vpop.trf.xlu0
        %v812 = vpop.trf.xlu0
        %v813 = vpop.trf.xlu0
        %v814 = vxor.u32 %v798, 2147483648
        %v815 = vxor.u32 %v799, 2147483648
        %v816 = vmul.f32 %v814, 1.442695
        %v817 = vpow.pop %v816
        %v818 = vmul.f32 %v815, 1.442695
        %v819 = vpow.pop %v818
        %v820 = vadd.f32 %v817, 1.0
        %v821 = vadd.f32 %v819, 1.0
        %v822 = vrcp.pop %v820
        %v823 = vmul.f32 %v820, %v822
        %v824 = vsub.f32 1.0, %v823
        %v825 = vmul.f32 %v822, %v824
        %v826 = vadd.f32 %v822, %v825
        %vm827 = vweird.f32 %v820
        %vm828 = vweird.f32 %v822
        %vm829 = vmor %vm827, %vm828
        %v830 = vsel %vm829, %v822, %v826
        %v831 = vand.u32 2147483647, %v820
        %vm832 = vcmp.eq.f32.partialorder %v831, 8.507059e+37
        %v833 = vand.u32 %v820, 2147483648
        %v834 = vor.u32 1.1754944e-38, %v833
        %v835 = vsel %vm832, %v834, %v830
        %v836 = vmul.f32 1.0, %v835
        %v837 = vrcp.pop %v821
        %v838 = vmul.f32 %v821, %v837
        %v839 = vsub.f32 1.0, %v838
        %v840 = vmul.f32 %v837, %v839
        %v841 = vadd.f32 %v837, %v840
        %vm842 = vweird.f32 %v821
        %vm843 = vweird.f32 %v837
        %vm844 = vmor %vm842, %vm843
        %v845 = vsel %vm844, %v837, %v841
        %v846 = vand.u32 2147483647, %v821
        %vm847 = vcmp.eq.f32.partialorder %v846, 8.507059e+37
        %v848 = vand.u32 %v821, 2147483648
        %v849 = vor.u32 1.1754944e-38, %v848
        %v850 = vsel %vm847, %v849, %v845
        %v851 = vmul.f32 1.0, %v850
        %853 = vset.pattern.permute.xlu0 0
        %854 = vperm.xlu0 %853, %v836
        %v855 = vpop.permute.xlu0 %854
        %858 = vset.pattern.permute.xlu0 0
        %859 = vperm.xlu0 %858, %v851
        %v860 = vpop.permute.xlu0 %859
        %v862 = vmul.f32 %v607, %v855
        %v863 = vmul.f32 %v608, %v855
        %v864 = vmul.f32 %v609, %v860
        %v865 = vmul.f32 %v610, %v860
        %866 = vst [vmem:[%s244] sm:$0xff] %v862
        %867 = vst [vmem:[%s244 + $0x8] sm:$0xff] %v863
        %868 = vst [vmem:[%s244 + $0x10] sm:$0xff] %v864
        %869 = vst [vmem:[%s244 + $0x18] sm:$0xff] %v865
        %s870 = sand.u32 %s140, 1
        %s871 = scalar_lea.sflag [#allocation4], %s870
        %s872 = sand.u32 %s140, 1
        %s873 = smul.addr %s872, 32
        %s874 = scalar_lea.vmem [#allocation5], %s873
        // Predicated region
        $region45: #{tpu_custom_call.1} parent=39 // pred_check
          %p875 = pneg %p150
        $region46: #{tpu_custom_call.1} parent=39 // pred_check_branch
          %877 = sbr.rel (%p875) target = $region48
        $region47: #{tpu_custom_call.1} parent=39 // pred_region
          %879 = vsyncadd %s871, 0
          %s880 = smul.addr %s22, 4
          %s881 = smul.addr %s880, 8
          %s882 = scalar_lea.hbm %s5, %s881
          %s883 = sshll.u32 %s874, 4
          %s884 = int_to_ptr.vmem [resolvable:$true] %s883
          %s885 = sshll.u32 %s882, 4
          %s886 = int_to_ptr.hbm [resolvable:$true] %s885
          %891 = dma.vmem_to_hbm [thread:$0]  %s884, 512, %s886, %s871, 256, 256, 16
        $region48: #{tpu_custom_call.1} parent=39 // pred_fallthru
          _
      $region40: #{tpu_custom_call.1} parent=5 // pred_fallthru
        _
      %p892 = scmp.le.s32.totalorder 2, %s17
      // Predicated region
      $region49: #{tpu_custom_call.1} parent=5 // pred_check
        %p893 = pneg %p892
      $region50: #{tpu_custom_call.1} parent=5 // pred_check_branch
        %895 = sbr.rel (%p893) target = $region52
      $region51: #{tpu_custom_call.1} parent=5 // pred_region
        %s896 = ssub.s32 %s17, 2
        // Predicated region
        $region53: #{tpu_custom_call.1} parent=51 // pred_check
          %p897 = pneg %p156
        $region54: #{tpu_custom_call.1} parent=51 // pred_check_branch
          %899 = sbr.rel (%p897) target = $region56
        $region55: #{tpu_custom_call.1} parent=51 // pred_region
          %s900 = sand.u32 %s141, 1
          %s901 = scalar_lea.sflag [#allocation4], %s900
          %s902 = sand.u32 %s141, 1
          %s903 = smul.addr %s902, 32
          %s904 = scalar_lea.vmem [#allocation5], %s903
          %906 = dma.done %s901, 512
        $region56: #{tpu_custom_call.1} parent=51 // pred_fallthru
          _
      $region52: #{tpu_custom_call.1} parent=5 // pred_fallthru
        _
    $region6: #{tpu_custom_call.1} parent=1 // loop_footer
      %s21 = sadd.s32 1, %s17
    $region7: #{tpu_custom_call.1} parent=1 // loop_footer_branch
      %16 = sbr.rel target = $region3
    $region8: #{tpu_custom_call.1} parent=1 // loop_exit
      _
    %907 = vsyncpa [#allocation3], 1
    %s908 = scalar_lea.sflag [#allocation3], 1
    %909 = vsyncpa %s908, 1
    %910 = vsyncpa [#allocation4], 1
    %s911 = scalar_lea.sflag [#allocation4], 1
    %912 = vsyncpa %s911, 1

</llo_original>
